<compile_context>
chip_gen: v5e
topology: v5e:2x2
jax: 0.10.0
libtpu: 0.0.40
codegen_flags: <defaults>
</compile_context>

<pallas_src>
import functools

import jax
import jax.numpy as jnp
from jax.experimental import pallas as pl
from jax.experimental.pallas import tpu as pltpu


def _round_up(v, m):
    return ((v + m - 1) // m) * m


def slp_kernel_eval(x_ref, w_ref, b_ref, o_ref):
    # ReLU (VPU) -> matmul (MXU, f32 acc) -> bias add (VPU)
    x = jnp.maximum(x_ref[...], 0.0)
    y = jnp.dot(x, w_ref[...], preferred_element_type=jnp.float32)
    o_ref[...] = (y + b_ref[...]).astype(o_ref.dtype)


def slp_kernel_train(x_ref, w_ref, b_ref, bits_ref, o_ref, *, threshold, scale):
    x = jnp.maximum(x_ref[...], 0.0)
    y = jnp.dot(x, w_ref[...], preferred_element_type=jnp.float32) + b_ref[...]
    # Integer-threshold dropout: bits are uniform in [0, 2^31); keep with
    # probability 1 - p.  One int compare + select + mul per element.
    keep = bits_ref[...] >= jnp.int32(threshold)
    o_ref[...] = jnp.where(keep, y * jnp.float32(scale), 0.0).astype(o_ref.dtype)


def slp_forward(x, w, b, *, p=0.1, training=False, rng_key=None, tm=512):
    """x: (B, rep_dim) f32, w: (rep_dim, num_labels) f32, b: (num_labels,) f32.

    Computes dropout(relu(x) @ w + b) (dropout identity in eval mode).
    """
    B, rep_dim = x.shape
    num_labels = w.shape[1]

    # --- lane-dense output: pad num_labels to a multiple of 128 -------------
    n_pad = _round_up(num_labels, 128)
    w_p = jnp.zeros((rep_dim, n_pad), w.dtype).at[:, :num_labels].set(w)
    b_p = jnp.zeros((1, n_pad), b.dtype).at[0, :num_labels].set(b)

    # --- batch tiling: size TM for v7x's VMEM (keep double-buffered working
    # set well under ~24 MiB), pad B up to a multiple of TM -------------------
    tm = min(_round_up(tm, 8), _round_up(B, 8))

    def _vmem_bytes(tm_):
        per_step = tm_ * rep_dim + tm_ * n_pad + (tm_ * n_pad if training else 0)
        resident = rep_dim * n_pad + n_pad
        return 4 * (2 * per_step + resident)   # double-buffered per-step tiles

    budget = 24 * (1 << 20)
    while tm > 8 and _vmem_bytes(tm) > budget:
        tm //= 2
    tm = max(_round_up(tm, 8), 8)

    b_pad = _round_up(B, tm)
    x_p = x if b_pad == B else jnp.zeros((b_pad, rep_dim), x.dtype).at[:B].set(x)
    grid = (b_pad // tm,)

    vmem_limit = min(_vmem_bytes(tm) + (4 << 20), 64 << 20)
    compiler_params = pltpu.CompilerParams(
        dimension_semantics=("parallel",),
        vmem_limit_bytes=vmem_limit,
    )

    x_spec = pl.BlockSpec((tm, rep_dim), lambda i: (i, 0))
    w_spec = pl.BlockSpec((rep_dim, n_pad), lambda i: (0, 0))   # resident
    b_spec = pl.BlockSpec((1, n_pad), lambda i: (0, 0))         # resident
    out_spec = pl.BlockSpec((tm, n_pad), lambda i: (i, 0))
    out_shape = jax.ShapeDtypeStruct((b_pad, n_pad), jnp.float32)

    if not training:
        out_full = pl.pallas_call(
            slp_kernel_eval,
            grid=grid,
            in_specs=[x_spec, w_spec, b_spec],
            out_specs=out_spec,
            out_shape=out_shape,
            compiler_params=compiler_params,
        )(x_p, w_p, b_p)
    else:
        if rng_key is None:
            rng_key = jax.random.PRNGKey(0)
        # Uniform 31-bit ints in [0, 2^31) -> signed-int compare is safe on
        # every backend (real TPU and interpret).
        raw = jax.random.bits(rng_key, (b_pad, n_pad), dtype=jnp.uint32)
        bits = jax.lax.shift_right_logical(raw, jnp.uint32(1)).astype(jnp.int32)
        threshold = int(round(p * float(2 ** 31)))
        scale = 1.0 / (1.0 - p)
        bits_spec = pl.BlockSpec((tm, n_pad), lambda i: (i, 0))

        kernel = functools.partial(
            slp_kernel_train, threshold=threshold, scale=scale)
        out_full = pl.pallas_call(
            kernel,
            grid=grid,
            in_specs=[x_spec, w_spec, b_spec, bits_spec],
            out_specs=out_spec,
            out_shape=out_shape,
            compiler_params=compiler_params,
        )(x_p, w_p, b_p, bits)

    return out_full[:B, :num_labels]


if __name__ == "__main__":
    # Small shapes consistent with the module's forward: (batch, rep_dim)
    batch, rep_dim, num_labels = 8, 32, 16

    key = jax.random.PRNGKey(0)
    kx, kw, kb, kd = jax.random.split(key, 4)

    # Deterministic nn.Linear-style init: U(-1/sqrt(rep_dim), 1/sqrt(rep_dim))
    bound = 1.0 / (rep_dim ** 0.5)
    x = jax.random.normal(kx, (batch, rep_dim), dtype=jnp.float32)
    w = jax.random.uniform(kw, (rep_dim, num_labels), dtype=jnp.float32,
                           minval=-bound, maxval=bound)
    b = jax.random.uniform(kb, (num_labels,), dtype=jnp.float32,
                           minval=-bound, maxval=bound)

    # Eval-mode forward (dropout is identity, matching module.eval()).
    out = jax.block_until_ready(slp_forward(x, w, b, p=0.1, training=False))
    ref = jnp.maximum(x, 0.0) @ w + b[None, :]
    assert out.shape == (batch, num_labels)
    assert jnp.allclose(out, ref, atol=1e-5, rtol=1e-5)

    # Training-mode dropout path: surviving entries must equal ref / (1 - p),
    # dropped entries must be exactly 0 (RNG stream won't match torch's).
    pdrop = 0.1
    out_train = jax.block_until_ready(
        slp_forward(x, w, b, p=pdrop, training=True, rng_key=kd))
    assert out_train.shape == (batch, num_labels)
    kept = out_train != 0.0
    assert jnp.allclose(jnp.where(kept, out_train, 0.0),
                        jnp.where(kept, ref / (1.0 - pdrop), 0.0),
                        atol=1e-5, rtol=1e-5)

    print("KERNEL_OK")
</pallas_src>

<mosaic_0001>
module attributes {stable_mosaic.version = 11 : i64} {
  func.func @slp_kernel_eval(%arg0: i32, %arg1: memref<8x32xf32, #tpu.memory_space<vmem>>, %arg2: memref<32x128xf32, #tpu.memory_space<vmem>>, %arg3: memref<1x128xf32, #tpu.memory_space<vmem>>, %arg4: memref<8x128xf32, #tpu.memory_space<vmem>>) attributes {dimension_semantics = [#tpu.dimension_semantics<parallel>], iteration_bounds = array<i64: 1>, scalar_prefetch = 0 : i64, scratch_operands = 0 : i64, tpu.core_type = #tpu.core_type<tc>, window_params = [{transform_indices = @transform_0, window_bounds = array<i64: 8, 32>}, {pipeline_mode = #tpu.pipeline_mode<synchronous>, transform_indices = @transform_1, window_bounds = array<i64: 32, 128>}, {pipeline_mode = #tpu.pipeline_mode<synchronous>, transform_indices = @transform_2, window_bounds = array<i64: 1, 128>}, {transform_indices = @transform_3, window_bounds = array<i64: 8, 128>}]} {
    %c0 = arith.constant 0 : index
    %c0_0 = arith.constant 0 : index
    %0 = vector.load %arg1[%c0, %c0_0] : memref<8x32xf32, #tpu.memory_space<vmem>>, vector<8x32xf32>
    %cst = arith.constant 0.000000e+00 : f32
    %1 = vector.broadcast %cst : f32 to vector<8x32xf32>
    %2 = arith.maximumf %0, %1 : vector<8x32xf32>
    %c0_1 = arith.constant 0 : index
    %c0_2 = arith.constant 0 : index
    %3 = vector.load %arg2[%c0_1, %c0_2] : memref<32x128xf32, #tpu.memory_space<vmem>>, vector<32x128xf32>
    %cst_3 = arith.constant dense<0.000000e+00> : vector<8x128xf32>
    %4 = tpu.matmul %2, %3, %cst_3 {dimension_numbers = #tpu.dot_dimension_numbers<[1], [0], [0], [1], [0, 0, 1, 1], [], []>} : vector<8x32xf32>, vector<32x128xf32>, vector<8x128xf32> -> vector<8x128xf32>
    %c0_4 = arith.constant 0 : index
    %c0_5 = arith.constant 0 : index
    %5 = vector.load %arg3[%c0_4, %c0_5] : memref<1x128xf32, #tpu.memory_space<vmem>>, vector<1x128xf32>
    %6 = vector.broadcast %5 : vector<1x128xf32> to vector<8x128xf32>
    %7 = arith.addf %4, %6 : vector<8x128xf32>
    %c0_6 = arith.constant 0 : index
    %c0_7 = arith.constant 0 : index
    %8 = vector.load %arg4[%c0_6, %c0_7] : memref<8x128xf32, #tpu.memory_space<vmem>>, vector<8x128xf32>
    tpu.vector_store %arg4[%c0_6, %c0_7], %7 {strides = array<i32>} : memref<8x128xf32, #tpu.memory_space<vmem>>, vector<8x128xf32>,
    return
  }
  func.func @transform_0(%arg0: i32) -> (i32, i32) {
    %c0_i32 = arith.constant 0 : i32
    %c0_i32_0 = arith.constant 0 : i32
    return %arg0, %c0_i32 : i32, i32
  }
  func.func @transform_1(%arg0: i32) -> (i32, i32) {
    %c0_i32 = arith.constant 0 : i32
    %c0_i32_0 = arith.constant 0 : i32
    %c0_i32_1 = arith.constant 0 : i32
    return %c0_i32, %c0_i32_0 : i32, i32
  }
  func.func @transform_2(%arg0: i32) -> (i32, i32) {
    %c0_i32 = arith.constant 0 : i32
    %c0_i32_0 = arith.constant 0 : i32
    %c0_i32_1 = arith.constant 0 : i32
    return %c0_i32, %c0_i32_0 : i32, i32
  }
  func.func @transform_3(%arg0: i32) -> (i32, i32) {
    %c0_i32 = arith.constant 0 : i32
    %c0_i32_0 = arith.constant 0 : i32
    return %arg0, %c0_i32 : i32, i32
  }
}

</mosaic_0001>

<llo_original>
// kernel: tpu_custom_call.1
$region0: #{tpu_custom_call.1}
  #allocation0 [shape = 'u32[]', space=smem, size = 0x4, offset = 0x4, fixed_abs, tag = 'smem constant byte address 0x4 - core index']
  #allocation1 [shape = 'u32[72,128]{1,0:T(1,128)}', space=vmem, size = 0x9000, scoped, tag = 'internal scratch']
  %s0 = inlined_call_operand.hbm [shape: f32[8,32], index: 0, kind: input, shape index: {}]
  %s1 = inlined_call_operand.hbm [shape: f32[32,128], index: 1, kind: input, shape index: {}]
  %s2 = inlined_call_operand.vmem [shape: f32[1,128], index: 2, kind: input, shape index: {}]
  %s3 = inlined_call_operand.hbm [shape: f32[8,128], index: 3, kind: output, shape index: {}]
  %s4 = sld [smem:[#allocation0]]
  $region30: #{tpu_custom_call.1} parent=0
    _
  %s6 = ssub.s32 1, %s4
  %s7 = scalar_select 0, %s6, %s4
  $region1: #{tpu_custom_call.1} parent=0
    #allocation2 [shape = 'u8[4096]{0}', space=vmem, size = 0x1000, scoped, tag = 'input window, operand 0, single buffered']
    #allocation3 [shape = 's32[1]{0}', space=sflag, size = 0x4, scoped, tag = 'scoped memory for tpu_custom_call.1']
    #allocation4 [shape = 's32[1]{0}', space=sflag, size = 0x4, scoped, tag = 'scoped memory for tpu_custom_call.1']
    #allocation5 [shape = 'u8[16384]{0}', space=vmem, size = 0x4000, scoped, tag = 'input window, operand 1, single buffered']
    #allocation6 [shape = 's32[1]{0}', space=sflag, size = 0x4, scoped, tag = 'scoped memory for tpu_custom_call.1']
    #allocation7 [shape = 'u8[4096]{0}', space=vmem, size = 0x1000, scoped, tag = 'output window, operand 0, single buffered']
    %8 = vsyncpa [#allocation3], 0
    %9 = vsyncpa [#allocation6], 0
    %10 = vsyncpa [#allocation4], 0
    // Predicated region
    $region2: #{tpu_custom_call.1} parent=1 // pred_check
      _
    $region3: #{tpu_custom_call.1} parent=1 // pred_check_branch
      %12 = sbr.rel (0) target = $region5
    $region4: #{tpu_custom_call.1} parent=1 // pred_region
      %14 = vsyncadd [#allocation3], 0
      %s16 = sshll.u32 %s0, 4
      %s17 = int_to_ptr.hbm [resolvable:$true] %s16
      %s18 = sshll.u32 [#allocation2], 4
      %s19 = int_to_ptr.vmem [resolvable:$true] %s18
      %21 = dma.hbm_to_vmem [thread:$0]  %s17, 128, %s19, [#allocation3]
    $region5: #{tpu_custom_call.1} parent=1 // pred_fallthru
      _
    // Predicated region
    $region6: #{tpu_custom_call.1} parent=1 // pred_check
      _
    $region7: #{tpu_custom_call.1} parent=1 // pred_check_branch
      %23 = sbr.rel (0) target = $region9
    $region8: #{tpu_custom_call.1} parent=1 // pred_region
      %25 = vsyncadd [#allocation6], 0
      %s26 = sshll.u32 %s1, 4
      %s27 = int_to_ptr.hbm [resolvable:$true] %s26
      %s28 = sshll.u32 [#allocation5], 4
      %s29 = int_to_ptr.vmem [resolvable:$true] %s28
      %34 = dma.hbm_to_vmem [thread:$0]  %s27, 512, %s29, [#allocation6], 128, 128, 8
    $region9: #{tpu_custom_call.1} parent=1 // pred_fallthru
      _
    // Predicated region
    $region10: #{tpu_custom_call.1} parent=1 // pred_check
      _
    $region11: #{tpu_custom_call.1} parent=1 // pred_check_branch
      %36 = sbr.rel (0) target = $region13
    $region12: #{tpu_custom_call.1} parent=1 // pred_region
      _
    $region13: #{tpu_custom_call.1} parent=1 // pred_fallthru
      _
    // Predicated region
    $region14: #{tpu_custom_call.1} parent=1 // pred_check
      _
    $region15: #{tpu_custom_call.1} parent=1 // pred_check_branch
      %38 = sbr.rel (0) target = $region17
    $region16: #{tpu_custom_call.1} parent=1 // pred_region
      %40 = dma.done [#allocation3], 128
    $region17: #{tpu_custom_call.1} parent=1 // pred_fallthru
      _
    // Predicated region
    $region18: #{tpu_custom_call.1} parent=1 // pred_check
      _
    $region19: #{tpu_custom_call.1} parent=1 // pred_check_branch
      %42 = sbr.rel (0) target = $region21
    $region20: #{tpu_custom_call.1} parent=1 // pred_region
      %44 = dma.done [#allocation6], 512
    $region21: #{tpu_custom_call.1} parent=1 // pred_fallthru
      _
    %v45 = vld [vmem:[#allocation2] sm:$0xff]
    %v46 = vmax.f32 %v45, 0.0
    %v47 = vld [vmem:[#allocation5] sm:$0xff]
    %v48 = vld [vmem:[#allocation5 + $0x8] sm:$0xff]
    %v49 = vld [vmem:[#allocation5 + $0x10] sm:$0xff]
    %v50 = vld [vmem:[#allocation5 + $0x18] sm:$0xff]
    %v51 = vld [vmem:[%s2] sm:$0x1]
    %v53 = vperm.slane %v51, 0
    %vm55 = vcmask 261120
    %v57 = vsel %vm55, %v46, 0
    %59 = vmatpush.msra.mxu0 0.0
    %60 = vmatpush.msra.mxu0 0.0
    %61 = vmatpush.msra.mxu0 0.0
    %62 = vmatpush.msra.mxu0 0.0
    %63 = vmatpush.msra.mxu0 0.0
    %64 = vmatpush.msra.mxu0 0.0
    %65 = vmatpush.msra.mxu0 0.0
    %66 = vmatpush.msra.mxu0 0.0
    %67 = vmatpush.msra.mxu0 0.0
    %68 = vmatpush.msra.mxu0 0.0
    %69 = vmatpush.msra.mxu0 0.0
    %70 = vmatpush.msra.mxu0 0.0
    %71 = vmatpush.msra.mxu0 %v50
    %72 = vmatpush.msra.mxu0 %v49
    %73 = vmatpush.msra.mxu0 %v48
    %74 = vmatpush.msra.mxu0 %v47
    %75 = vmatmul.f32.gmra.mxu0 %v57
    %v76 = vpop.f32.mrf.mxu0
    %v77 = vadd.f32 %v53, %v76
    %78 = vdwg.mxu0
    %79 = vst [vmem:[#allocation7] sm:$0xff] %v77
    // Predicated region
    $region22: #{tpu_custom_call.1} parent=1 // pred_check
      _
    $region23: #{tpu_custom_call.1} parent=1 // pred_check_branch
      %81 = sbr.rel (0) target = $region25
    $region24: #{tpu_custom_call.1} parent=1 // pred_region
      %83 = vsyncadd [#allocation4], 0
      %s85 = sshll.u32 [#allocation7], 4
      %s86 = int_to_ptr.vmem [resolvable:$true] %s85
      %s87 = sshll.u32 %s3, 4
      %s88 = int_to_ptr.hbm [resolvable:$true] %s87
      %90 = dma.vmem_to_hbm [thread:$0]  %s86, 128, %s88, [#allocation4]
    $region25: #{tpu_custom_call.1} parent=1 // pred_fallthru
      _
    // Predicated region
    $region26: #{tpu_custom_call.1} parent=1 // pred_check
      _
    $region27: #{tpu_custom_call.1} parent=1 // pred_check_branch
      %92 = sbr.rel (0) target = $region29
    $region28: #{tpu_custom_call.1} parent=1 // pred_region
      %94 = dma.done [#allocation4], 128
    $region29: #{tpu_custom_call.1} parent=1 // pred_fallthru
      _
    %95 = vsyncpa [#allocation3], 1
    %96 = vsyncpa [#allocation6], 1
    %97 = vsyncpa [#allocation4], 1

</llo_original>
